<compile_context>
chip_gen: v6e
topology: v6e:2x2x1
jax: 0.10.0
libtpu: 0.0.40
codegen_flags: <defaults>
</compile_context>

<pallas_src>
import functools

import jax
import jax.numpy as jnp
from jax.experimental import pallas as pl
from jax.experimental.pallas import tpu as pltpu


def _round_up(x, m):
    return ((x + m - 1) // m) * m


_NEG_BIG = -1e30   # finite "-inf" so padded class columns can never make NaNs


# ----------------------------------------------------------------------------
# Fused forward kernel:
#   (K-tiled) image matmul -> L2-normalize -> 100 * img @ txt.T -> softmax
# ----------------------------------------------------------------------------
def _fused_forward_kernel(x_ref, w_ref, txtn_ref, probs_ref, acc_ref, *,
                          n_classes):
    # grid = (batch tiles [parallel], K reduction [arbitrary, innermost])
    k = pl.program_id(1)

    @pl.when(k == 0)
    def _():
        acc_ref[...] = jnp.zeros_like(acc_ref)

    # bf16 cast folded into the kernel: x arrives f32 straight from HBM; the
    # convert is a VPU op hidden under the MXU matmul.
    acc_ref[...] += jnp.dot(x_ref[...].astype(jnp.bfloat16), w_ref[...],
                            preferred_element_type=jnp.float32)    # [TB, D] f32

    @pl.when(k == pl.num_programs(1) - 1)
    def _():
        img = acc_ref[...]
        # L2-normalize via rsqrt (EUP); eps keeps zero-padded batch rows
        # NaN-free (they produce a uniform row that is sliced away outside).
        inv_norm = jax.lax.rsqrt(
            jnp.sum(img * img, axis=-1, keepdims=True) + 1e-12)
        img_n = img * inv_norm

        # 100 * img_n @ txt_n.T without materializing a transpose (contract
        # the last dims on the MXU).  Kept in f32 on purpose: the 100x logit
        # scale amplifies bf16 rounding, and T is tiny vs. the image matmul.
        logits = 100.0 * jax.lax.dot_general(
            img_n, txtn_ref[...],
            dimension_numbers=(((1,), (1,)), ((), ())),
            preferred_element_type=jnp.float32)                    # [TB, Tp]

        # Lane-dense output: classes are padded to a multiple of 128; mask the
        # padded columns out of the softmax.
        col = jax.lax.broadcasted_iota(jnp.int32, logits.shape, 1)
        logits = jnp.where(col < n_classes, logits, _NEG_BIG)

        m = jnp.max(logits, axis=-1, keepdims=True)
        e = jnp.exp(logits - m)
        denom = jnp.sum(e, axis=-1, keepdims=True)
        probs_ref[...] = e * pl.reciprocal(denom, approx=False)


def pallas_fused_forward(images_flat, w_img_bf16, txt_n_padded, n_classes, *,
                         tile_b=None, max_tile_k=2048):
    """images_flat: [B, F] f32; w_img_bf16: [F, D] bf16; txt_n_padded: [Tp, D] f32."""
    B, F = images_flat.shape
    Fw, D = w_img_bf16.shape
    Tp, Dt = txt_n_padded.shape
    assert F == Fw and D == Dt
    assert D % 128 == 0 and Tp % 128 == 0

    # Batch tiling: large tiles fill the MXU and make the activation DMA
    # efficient; tiny batches only round up to a sublane multiple.
    if tile_b is None:
        tile_b = min(_round_up(B, 8), 128)
    Bp = _round_up(B, tile_b)

    # K-reduction tiling: stream the weight in (tile_k, D) slabs against an
    # f32 accumulator so realistic encoder sizes fit a 64 MiB-VMEM v7x core.
    tile_k = min(_round_up(F, 128), max_tile_k)
    Fp = _round_up(F, tile_k)
    n_k = Fp // tile_k

    x = images_flat                                  # keep f32; cast in-kernel
    if Bp != B or Fp != F:
        x = jnp.pad(x, ((0, Bp - B), (0, Fp - F)))
    w = w_img_bf16
    if Fp != F:
        w = jnp.pad(w, ((0, Fp - F), (0, 0)))
    txt = txt_n_padded.astype(jnp.float32)

    cost = pl.CostEstimate(
        flops=2 * Bp * Fp * D + 2 * Bp * D * Tp + 8 * Bp * Tp,
        transcendentals=Bp * Tp + Bp,
        bytes_accessed=int(x.size) * 4 + int(w.size) * 2
                       + int(txt.size) * 4 + Bp * Tp * 4,
    )

    kernel = functools.partial(_fused_forward_kernel, n_classes=n_classes)

    probs = pl.pallas_call(
        kernel,
        out_shape=jax.ShapeDtypeStruct((Bp, Tp), jnp.float32),
        grid=(Bp // tile_b, n_k),
        in_specs=[
            pl.BlockSpec((tile_b, tile_k), lambda i, k: (i, k),
                         memory_space=pltpu.VMEM),
            pl.BlockSpec((tile_k, D), lambda i, k: (k, 0),
                         memory_space=pltpu.VMEM),
            # txt_n is grid-invariant -> fetched once; at real class counts,
            # single-buffer it (pl.Buffered(1)) or stage into scratch.
            pl.BlockSpec((Tp, D), lambda i, k: (0, 0),
                         memory_space=pltpu.VMEM),
        ],
        out_specs=pl.BlockSpec((tile_b, Tp), lambda i, k: (i, 0),
                               memory_space=pltpu.VMEM),
        scratch_shapes=[pltpu.VMEM((tile_b, D), jnp.float32)],
        compiler_params=pltpu.CompilerParams(
            dimension_semantics=("parallel", "arbitrary"),
            vmem_limit_bytes=48 * 1024 * 1024),
        cost_estimate=cost,
    )(x, w, txt)
    return probs[:B, :n_classes]


# ----------------------------------------------------------------------------
# One-time text setup kernel (hoisted out of forward, result cached, padded
# to a lane-dense multiple of 128 classes)
# ----------------------------------------------------------------------------
def _text_encode_kernel(pooled_ref, w_ref, txtn_ref):
    feats = jnp.dot(pooled_ref[...], w_ref[...],
                    preferred_element_type=jnp.float32)             # [Tp, D]
    inv_norm = jax.lax.rsqrt(
        jnp.sum(feats * feats, axis=-1, keepdims=True) + 1e-12)
    txtn_ref[...] = feats * inv_norm


def pallas_text_encode_normalize(pooled_padded, w_txt):
    Tp, E = pooled_padded.shape
    E2, D = w_txt.shape
    assert E == E2
    return pl.pallas_call(
        _text_encode_kernel,
        out_shape=jax.ShapeDtypeStruct((Tp, D), jnp.float32),
        in_specs=[
            pl.BlockSpec((Tp, E), lambda: (0, 0), memory_space=pltpu.VMEM),
            pl.BlockSpec((E, D), lambda: (0, 0), memory_space=pltpu.VMEM),
        ],
        out_specs=pl.BlockSpec((Tp, D), lambda: (0, 0),
                               memory_space=pltpu.VMEM),
    )(pooled_padded.astype(jnp.float32), w_txt.astype(jnp.float32))


# ----------------------------------------------------------------------------
# VisualPrompter in JAX (parameters built deterministically in-script)
# ----------------------------------------------------------------------------
class VisualPrompterJAX:
    def __init__(self, pad_h, pad_w, img_hw=16, embed_dim=128,
                 vocab_size=49, txt_embed=32):
        # --- module-proper parameters (shapes per the PyTorch __init__);
        #     mask / perturbation are unused in forward(), as in PyTorch. ---
        mask = jnp.ones((3, 224, 224), jnp.float32)
        mask = mask.at[:, pad_h:224 - pad_h, pad_w:224 - pad_w].set(0.0)
        self.mask = mask
        self.perturbation = jnp.zeros((3, 224, 224), jnp.float32)

        # --- synthetic "clip_model" encoder weights (deterministic) ---
        # TODO(synk): the full CLIP image/text transformer towers are external
        #             to this module and have no single clean Pallas kernel;
        #             they are replaced by synthetic linear encoders.
        k = jax.random.PRNGKey(42)
        k_img, k_emb, k_txt = jax.random.split(k, 3)
        self.img_hw = img_hw
        flat = 3 * img_hw * img_hw
        self.w_img = (jax.random.normal(k_img, (flat, embed_dim), jnp.float32)
                      / jnp.sqrt(flat))
        self.w_img_bf16 = self.w_img.astype(jnp.bfloat16)   # MXU operand dtype
        self.tok_embed = jax.random.normal(k_emb, (vocab_size, txt_embed),
                                           jnp.float32)
        self.w_txt = (jax.random.normal(k_txt, (txt_embed, embed_dim),
                                        jnp.float32) / jnp.sqrt(txt_embed))
        self._txt_cache = None   # (text_inputs, n_classes, txt_n [Tp, D])

    def _text_features_normalized(self, text_inputs):
        # Text features are image-independent: encode + L2-normalize once,
        # padded to a lane-dense multiple of 128 classes, and reuse.
        # TODO(synk): cache keyed by object identity; use a content hash if
        #             callers pass fresh-but-equal arrays.
        if self._txt_cache is None or self._txt_cache[0] is not text_inputs:
            T = text_inputs.shape[0]
            emb = jnp.take(self.tok_embed, text_inputs, axis=0)   # [T, L, E]
            pooled = jnp.mean(emb, axis=1)                        # [T, E]
            Tp = _round_up(T, 128)
            if Tp != T:
                pooled = jnp.pad(pooled, ((0, Tp - T), (0, 0)))
            txt_n = pallas_text_encode_normalize(pooled, self.w_txt)  # [Tp, D]
            self._txt_cache = (text_inputs, T, txt_n)
        return self._txt_cache[1], self._txt_cache[2]

    def forward(self, images, text_inputs):
        B = images.shape[0]
        images_flat = images.reshape(B, -1)              # NCHW -> [B, 3*H*W]
        n_classes, txt_n = self._text_features_normalized(text_inputs)
        # image matmul + normalize + 100*img@txt.T + softmax, one fused kernel
        return pallas_fused_forward(images_flat, self.w_img_bf16, txt_n,
                                    n_classes)

    __call__ = forward


# ----------------------------------------------------------------------------
if __name__ == "__main__":
    key = jax.random.PRNGKey(0)
    k_img, k_txt = jax.random.split(key)

    B, C, H, W = 2, 3, 16, 16          # small NCHW images
    T, L, V = 8, 7, 49                 # 8 text prompts, context length 7

    images = jax.random.normal(k_img, (B, C, H, W), jnp.float32)
    text_inputs = jax.random.randint(k_txt, (T, L), 0, V, jnp.int32)

    prompter = VisualPrompterJAX(pad_h=4, pad_w=4, img_hw=H)
    probs = prompter(images, text_inputs)
    probs = jax.block_until_ready(probs)

    # sanity: plain-JAX reference with the same dtype policy
    # (bf16 MXU operands for the image projection, f32 everywhere else)
    img_f = jnp.dot(images.reshape(B, -1).astype(jnp.bfloat16),
                    prompter.w_img_bf16,
                    preferred_element_type=jnp.float32)
    txt_f = jnp.mean(jnp.take(prompter.tok_embed, text_inputs, axis=0),
                     axis=1) @ prompter.w_txt
    n_i = img_f / jnp.linalg.norm(img_f, axis=-1, keepdims=True)
    n_t = txt_f / jnp.linalg.norm(txt_f, axis=-1, keepdims=True)
    ref = jax.nn.softmax(100.0 * n_i @ n_t.T, axis=-1)

    assert probs.shape == (B, T)
    assert bool(jnp.all(jnp.isfinite(probs)))
    assert jnp.allclose(jnp.sum(probs, axis=-1), 1.0, atol=1e-5)
    assert jnp.allclose(probs, ref, atol=5e-4, rtol=5e-4)

    print("KERNEL_OK")
</pallas_src>

<mosaic_0001>
module attributes {stable_mosaic.version = 11 : i64} {
  func.func @_text_encode_kernel(%arg0: memref<128x32xf32, #tpu.memory_space<vmem>>, %arg1: memref<32x128xf32, #tpu.memory_space<vmem>>, %arg2: memref<128x128xf32, #tpu.memory_space<vmem>>) attributes {dimension_semantics = [], scalar_prefetch = 0 : i64, scratch_operands = 0 : i64, tpu.core_type = #tpu.core_type<tc>} {
    %c0 = arith.constant 0 : index
    %c0_0 = arith.constant 0 : index
    %0 = vector.load %arg0[%c0, %c0_0] : memref<128x32xf32, #tpu.memory_space<vmem>>, vector<128x32xf32>
    %c0_1 = arith.constant 0 : index
    %c0_2 = arith.constant 0 : index
    %1 = vector.load %arg1[%c0_1, %c0_2] : memref<32x128xf32, #tpu.memory_space<vmem>>, vector<32x128xf32>
    %cst = arith.constant dense<0.000000e+00> : vector<128x128xf32>
    %2 = tpu.matmul %0, %1, %cst {dimension_numbers = #tpu.dot_dimension_numbers<[1], [0], [0], [1], [0, 0, 1, 1], [], []>} : vector<128x32xf32>, vector<32x128xf32>, vector<128x128xf32> -> vector<128x128xf32>
    %3 = arith.mulf %2, %2 : vector<128x128xf32>
    %cst_3 = arith.constant dense<0.000000e+00> : vector<128xf32>
    %4 = vector.multi_reduction <add>, %3, %cst_3 [1] : vector<128x128xf32> to vector<128xf32>
    %5 = vector.shape_cast %4 : vector<128xf32> to vector<128x1xf32>
    %cst_4 = arith.constant 9.99999996E-13 : f32
    %6 = vector.broadcast %cst_4 : f32 to vector<128x1xf32>
    %7 = arith.addf %5, %6 : vector<128x1xf32>
    %8 = math.rsqrt %7 : vector<128x1xf32>
    %9 = vector.broadcast %8 : vector<128x1xf32> to vector<128x128xf32>
    %10 = arith.mulf %2, %9 : vector<128x128xf32>
    %c0_5 = arith.constant 0 : index
    %c0_6 = arith.constant 0 : index
    %11 = vector.load %arg2[%c0_5, %c0_6] : memref<128x128xf32, #tpu.memory_space<vmem>>, vector<128x128xf32>
    tpu.vector_store %arg2[%c0_5, %c0_6], %10 {strides = array<i32>} : memref<128x128xf32, #tpu.memory_space<vmem>>, vector<128x128xf32>,
    return
  }
}

</mosaic_0001>

<llo_original>
// kernel: tpu_custom_call.1
$region0: #{tpu_custom_call.1}
  #allocation0 [shape = 'u32[]', space=smem, size = 0x4, offset = 0x4, fixed_abs, tag = 'smem constant byte address 0x4 - core index']
  #allocation1 [shape = 'u32[144,128]{1,0:T(1,128)}', space=vmem, size = 0x12000, scoped, tag = 'internal scratch']
  %s0 = inlined_call_operand.vmem [shape: f32[128,32], index: 0, kind: input, shape index: {}]
  %s1 = inlined_call_operand.vmem [shape: f32[32,128], index: 1, kind: input, shape index: {}]
  %s2 = inlined_call_operand.hbm [shape: f32[128,128], index: 2, kind: output, shape index: {}]
  %s3 = sld [smem:[#allocation0]]
  $region18: #{tpu_custom_call.1} parent=0
    _
  %s5 = ssub.s32 1, %s3
  %s6 = scalar_select 0, %s5, %s3
  $region1: #{tpu_custom_call.1} parent=0
    #allocation2 [shape = 'u8[65536]{0}', space=vmem, size = 0x10000, scoped, tag = 'output window, operand 0, single buffered']
    #allocation3 [shape = 's32[1]{0}', space=sflag, size = 0x4, scoped, tag = 'scoped memory for tpu_custom_call.1']
    %7 = vsyncpa [#allocation3], 0
    // Predicated region
    $region2: #{tpu_custom_call.1} parent=1 // pred_check
      _
    $region3: #{tpu_custom_call.1} parent=1 // pred_check_branch
      %9 = sbr.rel (0) target = $region5
    $region4: #{tpu_custom_call.1} parent=1 // pred_region
      _
    $region5: #{tpu_custom_call.1} parent=1 // pred_fallthru
      _
    // Predicated region
    $region6: #{tpu_custom_call.1} parent=1 // pred_check
      _
    $region7: #{tpu_custom_call.1} parent=1 // pred_check_branch
      %11 = sbr.rel (0) target = $region9
    $region8: #{tpu_custom_call.1} parent=1 // pred_region
      _
    $region9: #{tpu_custom_call.1} parent=1 // pred_fallthru
      _
    %v12 = vld [vmem:[%s0] sm:$0xff]
    %v13 = vld [vmem:[%s0 + $0x8] sm:$0xff]
    %v14 = vld [vmem:[%s0 + $0x10] sm:$0xff]
    %v15 = vld [vmem:[%s0 + $0x18] sm:$0xff]
    %v16 = vld [vmem:[%s0 + $0x20] sm:$0xff]
    %v17 = vld [vmem:[%s0 + $0x28] sm:$0xff]
    %v18 = vld [vmem:[%s0 + $0x30] sm:$0xff]
    %v19 = vld [vmem:[%s0 + $0x38] sm:$0xff]
    %v20 = vld [vmem:[%s0 + $0x40] sm:$0xff]
    %v21 = vld [vmem:[%s0 + $0x48] sm:$0xff]
    %v22 = vld [vmem:[%s0 + $0x50] sm:$0xff]
    %v23 = vld [vmem:[%s0 + $0x58] sm:$0xff]
    %v24 = vld [vmem:[%s0 + $0x60] sm:$0xff]
    %v25 = vld [vmem:[%s0 + $0x68] sm:$0xff]
    %v26 = vld [vmem:[%s0 + $0x70] sm:$0xff]
    %v27 = vld [vmem:[%s0 + $0x78] sm:$0xff]
    %v28 = vld [vmem:[%s1] sm:$0xff]
    %v29 = vld [vmem:[%s1 + $0x8] sm:$0xff]
    %v30 = vld [vmem:[%s1 + $0x10] sm:$0xff]
    %v31 = vld [vmem:[%s1 + $0x18] sm:$0xff]
    %vm32 = vcmask 261120
    %v34 = vsel %vm32, %v12, 0
    %v37 = vsel %vm32, %v13, 0
    %v40 = vsel %vm32, %v14, 0
    %v43 = vsel %vm32, %v15, 0
    %v46 = vsel %vm32, %v16, 0
    %v49 = vsel %vm32, %v17, 0
    %v52 = vsel %vm32, %v18, 0
    %v55 = vsel %vm32, %v19, 0
    %v58 = vsel %vm32, %v20, 0
    %v61 = vsel %vm32, %v21, 0
    %v64 = vsel %vm32, %v22, 0
    %v67 = vsel %vm32, %v23, 0
    %v70 = vsel %vm32, %v24, 0
    %v73 = vsel %vm32, %v25, 0
    %v76 = vsel %vm32, %v26, 0
    %v79 = vsel %vm32, %v27, 0
    %81 = vmatprep.subr.mxu0 0.0
    %82 = vmatpush1.msra.mxu0 0.0
    %83 = vmatprep.subr.mxu0 0.0
    %84 = vmatpush1.msra.mxu0 0.0
    %85 = vmatprep.subr.mxu0 0.0
    %86 = vmatpush1.msra.mxu0 0.0
    %87 = vmatprep.subr.mxu0 0.0
    %88 = vmatpush1.msra.mxu0 0.0
    %89 = vmatprep.subr.mxu0 0.0
    %90 = vmatpush1.msra.mxu0 0.0
    %91 = vmatprep.subr.mxu0 0.0
    %92 = vmatpush1.msra.mxu0 0.0
    %93 = vmatprep.subr.mxu0 0.0
    %94 = vmatpush1.msra.mxu0 0.0
    %95 = vmatprep.subr.mxu0 0.0
    %96 = vmatpush1.msra.mxu0 0.0
    %97 = vmatprep.subr.mxu0 0.0
    %98 = vmatpush1.msra.mxu0 0.0
    %99 = vmatprep.subr.mxu0 0.0
    %100 = vmatpush1.msra.mxu0 0.0
    %101 = vmatprep.subr.mxu0 0.0
    %102 = vmatpush1.msra.mxu0 0.0
    %103 = vmatprep.subr.mxu0 0.0
    %104 = vmatpush1.msra.mxu0 0.0
    %105 = vmatprep.subr.mxu0 0.0
    %106 = vmatpush1.msra.mxu0 %v31
    %107 = vmatprep.subr.mxu0 0.0
    %108 = vmatpush1.msra.mxu0 %v30
    %109 = vmatprep.subr.mxu0 0.0
    %110 = vmatpush1.msra.mxu0 %v29
    %111 = vmatprep.subr.mxu0 0.0
    %112 = vmatpush1.msra.mxu0 %v28
    %113 = vmatprep.subr.mxu0 0.0
    %114 = vmatpush2.msra.mxu0 0.0
    %115 = vmatprep.subr.mxu0 0.0
    %116 = vmatpush2.msra.mxu0 0.0
    %117 = vmatprep.subr.mxu0 0.0
    %118 = vmatpush2.msra.mxu0 0.0
    %119 = vmatprep.subr.mxu0 0.0
    %120 = vmatpush2.msra.mxu0 0.0
    %121 = vmatprep.subr.mxu0 0.0
    %122 = vmatpush2.msra.mxu0 0.0
    %123 = vmatprep.subr.mxu0 0.0
    %124 = vmatpush2.msra.mxu0 0.0
    %125 = vmatprep.subr.mxu0 0.0
    %126 = vmatpush2.msra.mxu0 0.0
    %127 = vmatprep.subr.mxu0 0.0
    %128 = vmatpush2.msra.mxu0 0.0
    %129 = vmatprep.subr.mxu0 0.0
    %130 = vmatpush2.msra.mxu0 0.0
    %131 = vmatprep.subr.mxu0 0.0
    %132 = vmatpush2.msra.mxu0 0.0
    %133 = vmatprep.subr.mxu0 0.0
    %134 = vmatpush2.msra.mxu0 0.0
    %135 = vmatprep.subr.mxu0 0.0
    %136 = vmatpush2.msra.mxu0 0.0
    %137 = vmatprep.subr.mxu0 0.0
    %138 = vmatpush2.msra.mxu0 0.0
    %139 = vmatprep.subr.mxu0 0.0
    %140 = vmatpush2.msra.mxu0 0.0
    %141 = vmatprep.subr.mxu0 0.0
    %142 = vmatpush2.msra.mxu0 0.0
    %143 = vmatprep.subr.mxu0 0.0
    %144 = vmatpush2.msra.mxu0 0.0
    %145 = vmatprep.mubr.f32.mxu0 0.0
    %146 = vmatmul.mubr.f32.gmra.mxu0 %v34
    %v147 = vpop.f32.mrf.mxu0
    %v148 = vadd.f32 0.0, %v147
    %v149 = vpop.f32.mrf.mxu0
    %150 = vmatprep.mubr.f32.mxu0 0.0
    %151 = vmatmul.mubr.f32.gmra.mxu0 %v37
    %v152 = vpop.f32.mrf.mxu0
    %v153 = vadd.f32 0.0, %v152
    %v154 = vpop.f32.mrf.mxu0
    %155 = vmatprep.mubr.f32.mxu0 0.0
    %156 = vmatmul.mubr.f32.gmra.mxu0 %v40
    %v157 = vpop.f32.mrf.mxu0
    %v158 = vadd.f32 0.0, %v157
    %v159 = vpop.f32.mrf.mxu0
    %160 = vmatprep.mubr.f32.mxu0 0.0
    %161 = vmatmul.mubr.f32.gmra.mxu0 %v43
    %v162 = vpop.f32.mrf.mxu0
    %v163 = vadd.f32 0.0, %v162
    %v164 = vpop.f32.mrf.mxu0
    %165 = vmatprep.mubr.f32.mxu0 0.0
    %166 = vmatmul.mubr.f32.gmra.mxu0 %v46
    %v167 = vpop.f32.mrf.mxu0
    %v168 = vadd.f32 0.0, %v167
    %v169 = vpop.f32.mrf.mxu0
    %170 = vmatprep.mubr.f32.mxu0 0.0
    %171 = vmatmul.mubr.f32.gmra.mxu0 %v49
    %v172 = vpop.f32.mrf.mxu0
    %v173 = vadd.f32 0.0, %v172
    %v174 = vpop.f32.mrf.mxu0
    %175 = vmatprep.mubr.f32.mxu0 0.0
    %176 = vmatmul.mubr.f32.gmra.mxu0 %v52
    %v177 = vpop.f32.mrf.mxu0
    %v178 = vadd.f32 0.0, %v177
    %v179 = vpop.f32.mrf.mxu0
    %180 = vmatprep.mubr.f32.mxu0 0.0
    %181 = vmatmul.mubr.f32.gmra.mxu0 %v55
    %v182 = vpop.f32.mrf.mxu0
    %v183 = vadd.f32 0.0, %v182
    %v184 = vpop.f32.mrf.mxu0
    %185 = vmatprep.mubr.f32.mxu0 0.0
    %186 = vmatmul.mubr.f32.gmra.mxu0 %v58
    %v187 = vpop.f32.mrf.mxu0
    %v188 = vadd.f32 0.0, %v187
    %v189 = vpop.f32.mrf.mxu0
    %190 = vmatprep.mubr.f32.mxu0 0.0
    %191 = vmatmul.mubr.f32.gmra.mxu0 %v61
    %v192 = vpop.f32.mrf.mxu0
    %v193 = vadd.f32 0.0, %v192
    %v194 = vpop.f32.mrf.mxu0
    %195 = vmatprep.mubr.f32.mxu0 0.0
    %196 = vmatmul.mubr.f32.gmra.mxu0 %v64
    %v197 = vpop.f32.mrf.mxu0
    %v198 = vadd.f32 0.0, %v197
    %v199 = vpop.f32.mrf.mxu0
    %200 = vmatprep.mubr.f32.mxu0 0.0
    %201 = vmatmul.mubr.f32.gmra.mxu0 %v67
    %v202 = vpop.f32.mrf.mxu0
    %v203 = vadd.f32 0.0, %v202
    %v204 = vpop.f32.mrf.mxu0
    %205 = vmatprep.mubr.f32.mxu0 0.0
    %206 = vmatmul.mubr.f32.gmra.mxu0 %v70
    %v207 = vpop.f32.mrf.mxu0
    %v208 = vadd.f32 0.0, %v207
    %v209 = vpop.f32.mrf.mxu0
    %210 = vmatprep.mubr.f32.mxu0 0.0
    %211 = vmatmul.mubr.f32.gmra.mxu0 %v73
    %v212 = vpop.f32.mrf.mxu0
    %v213 = vadd.f32 0.0, %v212
    %v214 = vpop.f32.mrf.mxu0
    %215 = vmatprep.mubr.f32.mxu0 0.0
    %216 = vmatmul.mubr.f32.gmra.mxu0 %v76
    %v217 = vpop.f32.mrf.mxu0
    %v218 = vadd.f32 0.0, %v217
    %v219 = vpop.f32.mrf.mxu0
    %220 = vmatprep.mubr.f32.mxu0 0.0
    %221 = vmatmul.mubr.f32.gmra.mxu0 %v79
    %v222 = vpop.f32.mrf.mxu0
    %v223 = vadd.f32 0.0, %v222
    %v224 = vpop.f32.mrf.mxu0
    %225 = vdwg.mxu0
    %v226 = vmul.f32 %v148, %v148
    %v227 = vmul.f32 %v153, %v153
    %v228 = vmul.f32 %v158, %v158
    %v229 = vmul.f32 %v163, %v163
    %v230 = vmul.f32 %v168, %v168
    %v231 = vmul.f32 %v173, %v173
    %v232 = vmul.f32 %v178, %v178
    %v233 = vmul.f32 %v183, %v183
    %v234 = vmul.f32 %v188, %v188
    %v235 = vmul.f32 %v193, %v193
    %v236 = vmul.f32 %v198, %v198
    %v237 = vmul.f32 %v203, %v203
    %v238 = vmul.f32 %v208, %v208
    %v239 = vmul.f32 %v213, %v213
    %v240 = vmul.f32 %v218, %v218
    %v241 = vmul.f32 %v223, %v223
    %242 = vadd.xlane.f32.xlu0 %v226
    %v243 = vpop.xlane.xlu0 %242
    %244 = vadd.xlane.f32.xlu0 %v227
    %v245 = vpop.xlane.xlu0 %244
    %246 = vadd.xlane.f32.xlu0 %v228
    %v247 = vpop.xlane.xlu0 %246
    %248 = vadd.xlane.f32.xlu0 %v229
    %v249 = vpop.xlane.xlu0 %248
    %250 = vadd.xlane.f32.xlu0 %v230
    %v251 = vpop.xlane.xlu0 %250
    %252 = vadd.xlane.f32.xlu0 %v231
    %v253 = vpop.xlane.xlu0 %252
    %254 = vadd.xlane.f32.xlu0 %v232
    %v255 = vpop.xlane.xlu0 %254
    %256 = vadd.xlane.f32.xlu0 %v233
    %v257 = vpop.xlane.xlu0 %256
    %258 = vadd.xlane.f32.xlu0 %v234
    %v259 = vpop.xlane.xlu0 %258
    %260 = vadd.xlane.f32.xlu0 %v235
    %v261 = vpop.xlane.xlu0 %260
    %262 = vadd.xlane.f32.xlu0 %v236
    %v263 = vpop.xlane.xlu0 %262
    %264 = vadd.xlane.f32.xlu0 %v237
    %v265 = vpop.xlane.xlu0 %264
    %266 = vadd.xlane.f32.xlu0 %v238
    %v267 = vpop.xlane.xlu0 %266
    %268 = vadd.xlane.f32.xlu0 %v239
    %v269 = vpop.xlane.xlu0 %268
    %270 = vadd.xlane.f32.xlu0 %v240
    %v271 = vpop.xlane.xlu0 %270
    %272 = vadd.xlane.f32.xlu0 %v241
    %v273 = vpop.xlane.xlu0 %272
    %v274 = vadd.f32 %v243, 1e-12
    %v275 = vadd.f32 %v245, 1e-12
    %v276 = vadd.f32 %v247, 1e-12
    %v277 = vadd.f32 %v249, 1e-12
    %v278 = vadd.f32 %v251, 1e-12
    %v279 = vadd.f32 %v253, 1e-12
    %v280 = vadd.f32 %v255, 1e-12
    %v281 = vadd.f32 %v257, 1e-12
    %v282 = vadd.f32 %v259, 1e-12
    %v283 = vadd.f32 %v261, 1e-12
    %v284 = vadd.f32 %v263, 1e-12
    %v285 = vadd.f32 %v265, 1e-12
    %v286 = vadd.f32 %v267, 1e-12
    %v287 = vadd.f32 %v269, 1e-12
    %v288 = vadd.f32 %v271, 1e-12
    %v289 = vadd.f32 %v273, 1e-12
    %v290 = vrsqrt.pop %v274
    %v291 = vrsqrt.pop %v275
    %v292 = vrsqrt.pop %v276
    %v293 = vrsqrt.pop %v277
    %v294 = vrsqrt.pop %v278
    %v295 = vrsqrt.pop %v279
    %v296 = vrsqrt.pop %v280
    %v297 = vrsqrt.pop %v281
    %v298 = vrsqrt.pop %v282
    %v299 = vrsqrt.pop %v283
    %v300 = vrsqrt.pop %v284
    %v301 = vrsqrt.pop %v285
    %v302 = vrsqrt.pop %v286
    %v303 = vrsqrt.pop %v287
    %v304 = vrsqrt.pop %v288
    %v305 = vrsqrt.pop %v289
    %v306 = vmul.f32 %v148, %v290
    %v307 = vmul.f32 %v153, %v291
    %v308 = vmul.f32 %v158, %v292
    %v309 = vmul.f32 %v163, %v293
    %v310 = vmul.f32 %v168, %v294
    %v311 = vmul.f32 %v173, %v295
    %v312 = vmul.f32 %v178, %v296
    %v313 = vmul.f32 %v183, %v297
    %v314 = vmul.f32 %v188, %v298
    %v315 = vmul.f32 %v193, %v299
    %v316 = vmul.f32 %v198, %v300
    %v317 = vmul.f32 %v203, %v301
    %v318 = vmul.f32 %v208, %v302
    %v319 = vmul.f32 %v213, %v303
    %v320 = vmul.f32 %v218, %v304
    %v321 = vmul.f32 %v223, %v305
    %322 = vst [vmem:[#allocation2] sm:$0xff] %v306
    %323 = vst [vmem:[#allocation2 + $0x8] sm:$0xff] %v307
    %324 = vst [vmem:[#allocation2 + $0x10] sm:$0xff] %v308
    %325 = vst [vmem:[#allocation2 + $0x18] sm:$0xff] %v309
    %326 = vst [vmem:[#allocation2 + $0x20] sm:$0xff] %v310
    %327 = vst [vmem:[#allocation2 + $0x28] sm:$0xff] %v311
    %328 = vst [vmem:[#allocation2 + $0x30] sm:$0xff] %v312
    %329 = vst [vmem:[#allocation2 + $0x38] sm:$0xff] %v313
    %330 = vst [vmem:[#allocation2 + $0x40] sm:$0xff] %v314
    %331 = vst [vmem:[#allocation2 + $0x48] sm:$0xff] %v315
    %332 = vst [vmem:[#allocation2 + $0x50] sm:$0xff] %v316
    %333 = vst [vmem:[#allocation2 + $0x58] sm:$0xff] %v317
    %334 = vst [vmem:[#allocation2 + $0x60] sm:$0xff] %v318
    %335 = vst [vmem:[#allocation2 + $0x68] sm:$0xff] %v319
    %336 = vst [vmem:[#allocation2 + $0x70] sm:$0xff] %v320
    %337 = vst [vmem:[#allocation2 + $0x78] sm:$0xff] %v321
    // Predicated region
    $region10: #{tpu_custom_call.1} parent=1 // pred_check
      _
    $region11: #{tpu_custom_call.1} parent=1 // pred_check_branch
      %339 = sbr.rel (0) target = $region13
    $region12: #{tpu_custom_call.1} parent=1 // pred_region
      %s341 = ssub.s32 2048, 2048
      %342 = vsyncadd [#allocation3], %s341
      %s343 = sshll.u32 [#allocation2], 4
      %s344 = int_to_ptr.vmem [resolvable:$true] %s343
      %349 = dma.vmem_to_hbm [thread:$0]  %s344, 2048, %s2, [#allocation3], 128, 128, 8
    $region13: #{tpu_custom_call.1} parent=1 // pred_fallthru
      _
    // Predicated region
    $region14: #{tpu_custom_call.1} parent=1 // pred_check
      _
    $region15: #{tpu_custom_call.1} parent=1 // pred_check_branch
      %351 = sbr.rel (0) target = $region17
    $region16: #{tpu_custom_call.1} parent=1 // pred_region
      %352 = dma.done [#allocation3], 2048
    $region17: #{tpu_custom_call.1} parent=1 // pred_fallthru
      _
    %353 = vsyncpa [#allocation3], 1

</llo_original>
